<compile_context>
chip_gen: v5e
topology: v5e:2x2
jax: 0.10.0
libtpu: 0.0.40
codegen_flags: <defaults>
</compile_context>

<pallas_src>
import jax
import jax.numpy as jnp
import numpy as np
from jax.experimental import pallas as pl
from jax.experimental.pallas import tpu as pltpu


def _round_up(x, m):
    return (x + m - 1) // m * m


# --------------------------------------------------------------------------
# Kernel
# --------------------------------------------------------------------------
def _make_char_cnn_kernel(maxK):
    """Fused one-hot gather+conv matmul, masked running max, bias + ReLU.

    Refs (in order):
      idx_refs[k]: (Bt, Tc) int32   flattened shifted indices k*V + char
                                    (sentinel KVp for out-of-range positions)
      w_ref:       (KVp, Cp) bf16   fused table (x) conv weights
      b_ref:       (1, Cp)  f32     packed conv biases
      mask_ref:    (Tc, Cp) f32     additive mask: 0 inside each K's valid
                                    PyTorch conv-output range, -1e30 outside
      o_ref:       (Bt, Cp) f32     pooled output (lane-dense)
      acc_ref:     (Bt, Cp) f32     running max over sequence chunks (scratch)
    """

    def kernel(*refs):
        idx_refs = refs[:maxK]
        w_ref, b_ref, mask_ref, o_ref, acc_ref = refs[maxK:]

        t_id = pl.program_id(1)
        Bt, Tc = idx_refs[0].shape
        KVp, Cp = w_ref.shape

        @pl.when(t_id == 0)
        def _init():
            acc_ref[...] = jnp.full_like(acc_ref, -1e30)

        # One-hot of all maxK shifted indices, built natively at 128 lanes
        # (one compare per shift, merged with ORs, single cast to bf16).
        lane = jax.lax.broadcasted_iota(jnp.int32, (Bt, Tc, KVp), 2)
        hit = lane == idx_refs[0][...][:, :, None]
        for k in range(1, maxK):
            hit = jnp.logical_or(hit, lane == idx_refs[k][...][:, :, None])
        onehot = hit.astype(w_ref.dtype)                      # (Bt, Tc, KVp)

        # Single MXU matmul: gather + all conv kernel sizes at once.
        y = jnp.dot(onehot.reshape(Bt * Tc, KVp), w_ref[...],
                    preferred_element_type=jnp.float32)
        y = y.reshape(Bt, Tc, Cp) + mask_ref[...][None, :, :]

        # Running max over sequence chunks.
        acc_ref[...] = jnp.maximum(acc_ref[...], jnp.max(y, axis=1))

        @pl.when(t_id == pl.num_programs(1) - 1)
        def _finalize():
            # bias + ReLU after the max == PyTorch's relu-then-maxpool.
            o_ref[...] = jnp.maximum(acc_ref[...] + b_ref[...], 0.0)

    return kernel


# --------------------------------------------------------------------------
# Parameter packing (host side, runs once)
# --------------------------------------------------------------------------
def pack_fused_params(emb_table, conv_weights, conv_biases, kernel_sizes):
    """Fuse embedding table into each Conv2d(1, C, (K, E)) weight.

    W_fused[k*V + v, c_global] = sum_e table[v, e] * w_K[c, 0, k, e]
    """
    V, E = emb_table.shape
    C = conv_weights[0].shape[0]
    maxK = max(kernel_sizes)
    nK = len(kernel_sizes)
    C_pad = _round_up(C * nK, 128)
    KVp = _round_up(maxK * V, 128)

    W = jnp.zeros((KVp, C_pad), jnp.float32)
    b = jnp.zeros((1, C_pad), jnp.float32)
    for gi, (K, w, bb) in enumerate(zip(kernel_sizes, conv_weights, conv_biases)):
        # PyTorch Conv2d weight layout: (C, 1, K, E)
        wf = jnp.einsum("ve,cke->kvc", emb_table, w[:, 0, :, :])   # (K, V, C)
        for k in range(K):
            W = W.at[k * V:(k + 1) * V, gi * C:(gi + 1) * C].set(wf[k])
        b = b.at[0, gi * C:(gi + 1) * C].set(bb)
    return W.astype(jnp.bfloat16), b, C_pad, KVp


def _build_seq_mask(kernel_sizes, C, L, C_pad, T_pad, maxK):
    """Additive mask restricting each K's max to its PyTorch conv output range."""
    maxpad = maxK - 1
    mask = np.zeros((T_pad, C_pad), np.float32)
    for gi, K in enumerate(kernel_sizes):
        lo = maxpad - (K - 1)        # first PyTorch-equivalent output position
        hi = maxpad + L              # one past the last (output length L+K-1)
        cols = slice(gi * C, (gi + 1) * C)
        mask[:lo, cols] = -1e30
        mask[hi:, cols] = -1e30
    return jnp.asarray(mask)


# --------------------------------------------------------------------------
# Forward wrapper
# --------------------------------------------------------------------------
def char_embedding_forward(X, emb_table, conv_weights, conv_biases, kernel_sizes):
    """Equivalent of CharEmbedding.forward in eval mode (dropout == identity)."""
    B, L = X.shape
    V, E = emb_table.shape
    C = conv_weights[0].shape[0]
    maxK = max(kernel_sizes)
    nK = len(kernel_sizes)
    C_total = C * nK
    maxpad = maxK - 1

    W_fused, b_all, C_pad, KVp = pack_fused_params(
        emb_table, conv_weights, conv_biases, kernel_sizes)

    # --- sequence tiling ---------------------------------------------------
    # The idx blocks are 2-D (B_tile, T_chunk) with T_chunk in lanes, so the
    # chunk must be a multiple of 128 or the full (8-aligned) sequence extent.
    T_need = L + maxpad
    if T_need <= 256:
        T_chunk = T_pad = _round_up(T_need, 8)      # single sequence chunk
    else:
        T_chunk = 128
        T_pad = _round_up(T_need, 128)
    num_t = T_pad // T_chunk

    # --- batch tiling under a VMEM row budget (v7x-safe: ~<=20 MiB temps) ---
    ROW_BUDGET = 16384                               # B_tile * T_chunk rows/step
    B_tile = max(8, min(512, (ROW_BUDGET // T_chunk) // 8 * 8))
    B_pad8 = _round_up(B, 8)
    if B_pad8 <= B_tile:
        B_tile = B_pad8
        # v7x has two TensorCores: keep >=2 "parallel" steps when batch allows.
        if num_t == 1 and B_pad8 >= 16:
            B_tile = _round_up(B_pad8 // 2, 8)
    B_pad = _round_up(B, B_tile)
    num_b = B_pad // B_tile

    # --- shifted flattened indices (one small XLA gather, outside the kernel)
    # idx_k[b, t] = k*V + X[b, t + k - maxpad]  if in range else KVp (sentinel)
    Xp = jnp.pad(X.astype(jnp.int32), ((0, B_pad - B), (0, 0)))
    t_ax = jnp.arange(T_pad)
    idx_list = []
    for k in range(maxK):
        s = t_ax + (k - maxpad)
        valid = (s >= 0) & (s < L)
        g = Xp[:, jnp.clip(s, 0, L - 1)]                      # (B_pad, T_pad)
        idx_list.append(
            jnp.where(valid[None, :], g + k * V, KVp).astype(jnp.int32))

    mask = _build_seq_mask(kernel_sizes, C, L, C_pad, T_pad, maxK)

    kernel = _make_char_cnn_kernel(maxK)
    flops = 2 * B_pad * T_pad * KVp * C_pad
    bytes_accessed = (B_pad * T_pad * maxK * 4 + KVp * C_pad * 2
                      + T_pad * C_pad * 4 + C_pad * 4 + B_pad * C_pad * 4)

    out = pl.pallas_call(
        kernel,
        out_shape=jax.ShapeDtypeStruct((B_pad, C_pad), jnp.float32),
        grid=(num_b, num_t),
        in_specs=(
            [pl.BlockSpec((B_tile, T_chunk), lambda i, t: (i, t))
             for _ in range(maxK)]
            + [pl.BlockSpec((KVp, C_pad), lambda i, t: (0, 0)),
               pl.BlockSpec((1, C_pad), lambda i, t: (0, 0)),
               pl.BlockSpec((T_chunk, C_pad), lambda i, t: (t, 0))]),
        out_specs=pl.BlockSpec((B_tile, C_pad), lambda i, t: (i, 0)),
        scratch_shapes=[pltpu.VMEM((B_tile, C_pad), jnp.float32)],
        compiler_params=pltpu.CompilerParams(
            dimension_semantics=("parallel", "arbitrary"),
            vmem_limit_bytes=48 * 1024 * 1024),
        cost_estimate=pl.CostEstimate(flops=flops, transcendentals=0,
                                      bytes_accessed=bytes_accessed),
    )(*idx_list, W_fused, b_all, mask)

    # NOTE: downstream consumers that can take the padded lane-dense
    # (B_pad, C_pad) slab should do so and slice later; here we return the
    # exact module output shape.
    return out[:B, :C_total]


# --------------------------------------------------------------------------
# Pure-JAX reference (independent, full f32) and demo
# --------------------------------------------------------------------------
def _reference_forward(X, emb_table, conv_weights, conv_biases, kernel_sizes):
    emb = jnp.take(emb_table, X, axis=0)                      # (B, L, E) f32
    B, L, E = emb.shape
    outs = []
    for K, w, b in zip(kernel_sizes, conv_weights, conv_biases):
        C = w.shape[0]
        pad = K - 1
        ep = jnp.pad(emb, ((0, 0), (pad, pad), (0, 0)))
        T = L + K - 1
        conv = jnp.zeros((B, T, C), jnp.float32)
        for k in range(K):
            conv = conv + jnp.einsum("bte,ce->btc", ep[:, k:k + T, :],
                                     w[:, 0, k, :])
        conv = jnp.maximum(conv + b[None, None, :], 0.0)      # ReLU
        outs.append(jnp.max(conv, axis=1))                    # max_pool1d over seq
    return jnp.concatenate(outs, axis=1)


if __name__ == "__main__":
    # Small, deterministic synthetic configuration.
    vocab_size = 32
    embedding_size = 32      # E
    out_channels = 16        # C
    kernel_sizes = (2, 3, 4)
    padding_idx = 0
    B, L = 2, 8              # batch, char-sequence length

    key = jax.random.PRNGKey(0)
    k_emb, k_x, *k_convs = jax.random.split(key, 2 + 2 * len(kernel_sizes))

    # nn.Embedding weight (vocab, E); padding_idx row zeroed.
    emb_table = jax.random.normal(k_emb, (vocab_size, embedding_size), jnp.float32)
    emb_table = emb_table.at[padding_idx].set(0.0)

    # Conv2d(1, C, (K, E)) weights in the PyTorch layout (C, 1, K, E).
    conv_weights, conv_biases = [], []
    for i, K in enumerate(kernel_sizes):
        kw, kb = k_convs[2 * i], k_convs[2 * i + 1]
        conv_weights.append(
            0.1 * jax.random.normal(kw, (out_channels, 1, K, embedding_size),
                                    jnp.float32))
        conv_biases.append(0.1 * jax.random.normal(kb, (out_channels,), jnp.float32))

    # Integer char indices (B, L).
    X = jax.random.randint(k_x, (B, L), 0, vocab_size, dtype=jnp.int32)

    out = char_embedding_forward(X, emb_table, conv_weights, conv_biases,
                                 kernel_sizes)
    out = jax.block_until_ready(out)
    assert out.shape == (B, out_channels * len(kernel_sizes)), out.shape
    assert out.dtype == jnp.float32

    ref = _reference_forward(X, emb_table, conv_weights, conv_biases, kernel_sizes)
    max_err = float(jnp.max(jnp.abs(out - ref)))
    # Fused weights are bf16-quantized for the MXU (accepted inference-time
    # numerics change); the one-hot selection + f32 accumulation are exact.
    assert max_err < 3e-2, f"mismatch vs reference: max_err={max_err}"

    print("KERNEL_OK")
</pallas_src>

<mosaic_0001>
module attributes {stable_mosaic.version = 11 : i64} {
  func.func @kernel(%arg0: i32, %arg1: i32, %arg2: memref<8x16xi32, #tpu.memory_space<vmem>>, %arg3: memref<8x16xi32, #tpu.memory_space<vmem>>, %arg4: memref<8x16xi32, #tpu.memory_space<vmem>>, %arg5: memref<8x16xi32, #tpu.memory_space<vmem>>, %arg6: memref<128x128xbf16, #tpu.memory_space<vmem>>, %arg7: memref<1x128xf32, #tpu.memory_space<vmem>>, %arg8: memref<16x128xf32, #tpu.memory_space<vmem>>, %arg9: memref<8x128xf32, #tpu.memory_space<vmem>>, %arg10: memref<8x128xf32, #tpu.memory_space<vmem>>) attributes {dimension_semantics = [#tpu.dimension_semantics<parallel>, #tpu.dimension_semantics<arbitrary>], iteration_bounds = array<i64: 1, 1>, scalar_prefetch = 0 : i64, scratch_operands = 1 : i64, tpu.core_type = #tpu.core_type<tc>, window_params = [{transform_indices = @transform_0, window_bounds = array<i64: 8, 16>}, {transform_indices = @transform_1, window_bounds = array<i64: 8, 16>}, {transform_indices = @transform_2, window_bounds = array<i64: 8, 16>}, {transform_indices = @transform_3, window_bounds = array<i64: 8, 16>}, {pipeline_mode = #tpu.pipeline_mode<synchronous>, transform_indices = @transform_4, window_bounds = array<i64: 128, 128>}, {pipeline_mode = #tpu.pipeline_mode<synchronous>, transform_indices = @transform_5, window_bounds = array<i64: 1, 128>}, {transform_indices = @transform_6, window_bounds = array<i64: 16, 128>}, {transform_indices = @transform_7, window_bounds = array<i64: 8, 128>}]} {
    %c0_i32 = arith.constant 0 : i32
    %0 = arith.cmpi eq, %arg1, %c0_i32 : i32
    %1 = arith.extui %0 : i1 to i32
    %c0_i32_0 = arith.constant 0 : i32
    %2 = arith.cmpi ne, %1, %c0_i32_0 : i32
    scf.if %2 {
      %cst_19 = arith.constant -1.000000e+30 : f32
      %41 = vector.broadcast %cst_19 : f32 to vector<8x128xf32>
      %c0_20 = arith.constant 0 : index
      %c0_21 = arith.constant 0 : index
      %42 = vector.load %arg10[%c0_20, %c0_21] : memref<8x128xf32, #tpu.memory_space<vmem>>, vector<8x128xf32>
      tpu.vector_store %arg10[%c0_20, %c0_21], %41 {strides = array<i32>} : memref<8x128xf32, #tpu.memory_space<vmem>>, vector<8x128xf32>,
    } else {
    }
    %3 = tpu.iota {dimensions = array<i32: 2>} : vector<8x16x128xi32>
    %c0 = arith.constant 0 : index
    %c0_1 = arith.constant 0 : index
    %4 = vector.load %arg2[%c0, %c0_1] : memref<8x16xi32, #tpu.memory_space<vmem>>, vector<8x16xi32>
    %5 = vector.shape_cast %4 : vector<8x16xi32> to vector<8x16x1xi32>
    %6 = vector.broadcast %5 : vector<8x16x1xi32> to vector<8x16x128xi32>
    %7 = arith.cmpi eq, %3, %6 : vector<8x16x128xi32>
    %c0_2 = arith.constant 0 : index
    %c0_3 = arith.constant 0 : index
    %8 = vector.load %arg3[%c0_2, %c0_3] : memref<8x16xi32, #tpu.memory_space<vmem>>, vector<8x16xi32>
    %9 = vector.shape_cast %8 : vector<8x16xi32> to vector<8x16x1xi32>
    %10 = vector.broadcast %9 : vector<8x16x1xi32> to vector<8x16x128xi32>
    %11 = arith.cmpi eq, %3, %10 : vector<8x16x128xi32>
    %12 = arith.ori %7, %11 : vector<8x16x128xi1>
    %c0_4 = arith.constant 0 : index
    %c0_5 = arith.constant 0 : index
    %13 = vector.load %arg4[%c0_4, %c0_5] : memref<8x16xi32, #tpu.memory_space<vmem>>, vector<8x16xi32>
    %14 = vector.shape_cast %13 : vector<8x16xi32> to vector<8x16x1xi32>
    %15 = vector.broadcast %14 : vector<8x16x1xi32> to vector<8x16x128xi32>
    %16 = arith.cmpi eq, %3, %15 : vector<8x16x128xi32>
    %17 = arith.ori %12, %16 : vector<8x16x128xi1>
    %c0_6 = arith.constant 0 : index
    %c0_7 = arith.constant 0 : index
    %18 = vector.load %arg5[%c0_6, %c0_7] : memref<8x16xi32, #tpu.memory_space<vmem>>, vector<8x16xi32>
    %19 = vector.shape_cast %18 : vector<8x16xi32> to vector<8x16x1xi32>
    %20 = vector.broadcast %19 : vector<8x16x1xi32> to vector<8x16x128xi32>
    %21 = arith.cmpi eq, %3, %20 : vector<8x16x128xi32>
    %22 = arith.ori %17, %21 : vector<8x16x128xi1>
    %23 = arith.extui %22 : vector<8x16x128xi1> to vector<8x16x128xi32>
    %24 = arith.sitofp %23 : vector<8x16x128xi32> to vector<8x16x128xf32>
    %25 = arith.truncf %24 : vector<8x16x128xf32> to vector<8x16x128xbf16>
    %26 = vector.shape_cast %25 : vector<8x16x128xbf16> to vector<128x128xbf16>
    %c0_8 = arith.constant 0 : index
    %c0_9 = arith.constant 0 : index
    %27 = vector.load %arg6[%c0_8, %c0_9] : memref<128x128xbf16, #tpu.memory_space<vmem>>, vector<128x128xbf16>
    %cst = arith.constant dense<0.000000e+00> : vector<128x128xf32>
    %28 = tpu.matmul %26, %27, %cst {dimension_numbers = #tpu.dot_dimension_numbers<[1], [0], [0], [1], [0, 0, 1, 1], [], []>} : vector<128x128xbf16>, vector<128x128xbf16>, vector<128x128xf32> -> vector<128x128xf32>
    %29 = vector.shape_cast %28 : vector<128x128xf32> to vector<8x16x128xf32>
    %c0_10 = arith.constant 0 : index
    %c0_11 = arith.constant 0 : index
    %30 = vector.load %arg8[%c0_10, %c0_11] : memref<16x128xf32, #tpu.memory_space<vmem>>, vector<16x128xf32>
    %31 = vector.shape_cast %30 : vector<16x128xf32> to vector<1x16x128xf32>
    %32 = vector.broadcast %31 : vector<1x16x128xf32> to vector<8x16x128xf32>
    %33 = arith.addf %29, %32 : vector<8x16x128xf32>
    %c0_12 = arith.constant 0 : index
    %c0_13 = arith.constant 0 : index
    %34 = vector.load %arg10[%c0_12, %c0_13] : memref<8x128xf32, #tpu.memory_space<vmem>>, vector<8x128xf32>
    %cst_14 = arith.constant dense<0xFF800000> : vector<8x128xf32>
    %35 = vector.multi_reduction <maximumf>, %33, %cst_14 [1] : vector<8x16x128xf32> to vector<8x128xf32>
    %36 = arith.maximumf %34, %35 : vector<8x128xf32>
    %c0_15 = arith.constant 0 : index
    %c0_16 = arith.constant 0 : index
    %37 = vector.load %arg10[%c0_15, %c0_16] : memref<8x128xf32, #tpu.memory_space<vmem>>, vector<8x128xf32>
    tpu.vector_store %arg10[%c0_15, %c0_16], %36 {strides = array<i32>} : memref<8x128xf32, #tpu.memory_space<vmem>>, vector<8x128xf32>,
    %c0_i32_17 = arith.constant 0 : i32
    %38 = arith.cmpi eq, %arg1, %c0_i32_17 : i32
    %39 = arith.extui %38 : i1 to i32
    %c0_i32_18 = arith.constant 0 : i32
    %40 = arith.cmpi ne, %39, %c0_i32_18 : i32
    scf.if %40 {
      %c0_19 = arith.constant 0 : index
      %c0_20 = arith.constant 0 : index
      %41 = vector.load %arg10[%c0_19, %c0_20] : memref<8x128xf32, #tpu.memory_space<vmem>>, vector<8x128xf32>
      %c0_21 = arith.constant 0 : index
      %c0_22 = arith.constant 0 : index
      %42 = vector.load %arg7[%c0_21, %c0_22] : memref<1x128xf32, #tpu.memory_space<vmem>>, vector<1x128xf32>
      %43 = vector.broadcast %42 : vector<1x128xf32> to vector<8x128xf32>
      %44 = arith.addf %41, %43 : vector<8x128xf32>
      %cst_23 = arith.constant 0.000000e+00 : f32
      %45 = vector.broadcast %cst_23 : f32 to vector<8x128xf32>
      %46 = arith.maximumf %44, %45 : vector<8x128xf32>
      %c0_24 = arith.constant 0 : index
      %c0_25 = arith.constant 0 : index
      %47 = vector.load %arg9[%c0_24, %c0_25] : memref<8x128xf32, #tpu.memory_space<vmem>>, vector<8x128xf32>
      tpu.vector_store %arg9[%c0_24, %c0_25], %46 {strides = array<i32>} : memref<8x128xf32, #tpu.memory_space<vmem>>, vector<8x128xf32>,
    } else {
    }
    return
  }
  func.func @transform_0(%arg0: i32, %arg1: i32) -> (i32, i32) {
    %c0_i32 = arith.constant 0 : i32
    return %arg0, %arg1 : i32, i32
  }
  func.func @transform_1(%arg0: i32, %arg1: i32) -> (i32, i32) {
    %c0_i32 = arith.constant 0 : i32
    return %arg0, %arg1 : i32, i32
  }
  func.func @transform_2(%arg0: i32, %arg1: i32) -> (i32, i32) {
    %c0_i32 = arith.constant 0 : i32
    return %arg0, %arg1 : i32, i32
  }
  func.func @transform_3(%arg0: i32, %arg1: i32) -> (i32, i32) {
    %c0_i32 = arith.constant 0 : i32
    return %arg0, %arg1 : i32, i32
  }
  func.func @transform_4(%arg0: i32, %arg1: i32) -> (i32, i32) {
    %c0_i32 = arith.constant 0 : i32
    %c0_i32_0 = arith.constant 0 : i32
    %c0_i32_1 = arith.constant 0 : i32
    return %c0_i32, %c0_i32_0 : i32, i32
  }
  func.func @transform_5(%arg0: i32, %arg1: i32) -> (i32, i32) {
    %c0_i32 = arith.constant 0 : i32
    %c0_i32_0 = arith.constant 0 : i32
    %c0_i32_1 = arith.constant 0 : i32
    return %c0_i32, %c0_i32_0 : i32, i32
  }
  func.func @transform_6(%arg0: i32, %arg1: i32) -> (i32, i32) {
    %c0_i32 = arith.constant 0 : i32
    %c0_i32_0 = arith.constant 0 : i32
    return %arg1, %c0_i32 : i32, i32
  }
  func.func @transform_7(%arg0: i32, %arg1: i32) -> (i32, i32) {
    %c0_i32 = arith.constant 0 : i32
    %c0_i32_0 = arith.constant 0 : i32
    return %arg0, %c0_i32 : i32, i32
  }
}

</mosaic_0001>

<llo_original>
// kernel: tpu_custom_call.1
$region0: #{tpu_custom_call.1}
  #allocation0 [shape = 'u32[]', space=smem, size = 0x4, offset = 0x4, fixed_abs, tag = 'smem constant byte address 0x4 - core index']
  #allocation1 [shape = 'u32[72,128]{1,0:T(1,128)}', space=vmem, size = 0x9000, scoped, tag = 'internal scratch']
  #allocation2 [shape = 'f32[8,128]{1,0:T(8,128)}', space=vmem, size = 0x1000, scoped, tag = 'scratch operand']
  %s0 = inlined_call_operand.hbm [shape: s32[8,16], index: 0, kind: input, shape index: {}]
  %s1 = inlined_call_operand.hbm [shape: s32[8,16], index: 1, kind: input, shape index: {}]
  %s2 = inlined_call_operand.hbm [shape: s32[8,16], index: 2, kind: input, shape index: {}]
  %s3 = inlined_call_operand.hbm [shape: s32[8,16], index: 3, kind: input, shape index: {}]
  %s4 = inlined_call_operand.hbm [shape: bf16[128,128], index: 4, kind: input, shape index: {}]
  %s5 = inlined_call_operand.vmem [shape: f32[1,128], index: 5, kind: input, shape index: {}]
  %s6 = inlined_call_operand.hbm [shape: f32[16,128], index: 6, kind: input, shape index: {}]
  %s7 = inlined_call_operand.hbm [shape: f32[8,128], index: 7, kind: output, shape index: {}]
  %s8 = sld [smem:[#allocation0]]
  $region70: #{tpu_custom_call.1} parent=0
    _
  %s10 = ssub.s32 1, %s8
  %s11 = scalar_select 0, %s10, %s8
  $region1: #{tpu_custom_call.1} parent=0
    #allocation3 [shape = 'u8[4096]{0}', space=vmem, size = 0x1000, scoped, tag = 'input window, operand 0, single buffered']
    #allocation4 [shape = 's32[1]{0}', space=sflag, size = 0x4, scoped, tag = 'scoped memory for tpu_custom_call.1']
    #allocation5 [shape = 's32[1]{0}', space=sflag, size = 0x4, scoped, tag = 'scoped memory for tpu_custom_call.1']
    #allocation6 [shape = 'u8[4096]{0}', space=vmem, size = 0x1000, scoped, tag = 'input window, operand 1, single buffered']
    #allocation7 [shape = 's32[1]{0}', space=sflag, size = 0x4, scoped, tag = 'scoped memory for tpu_custom_call.1']
    #allocation8 [shape = 'u8[4096]{0}', space=vmem, size = 0x1000, scoped, tag = 'input window, operand 2, single buffered']
    #allocation9 [shape = 'u8[4096]{0}', space=vmem, size = 0x1000, scoped, tag = 'input window, operand 3, single buffered']
    #allocation10 [shape = 's32[1]{0}', space=sflag, size = 0x4, scoped, tag = 'scoped memory for tpu_custom_call.1']
    #allocation11 [shape = 'u8[32768]{0}', space=vmem, size = 0x8000, scoped, tag = 'input window, operand 4, single buffered']
    #allocation12 [shape = 'u8[8192]{0}', space=vmem, size = 0x2000, scoped, tag = 'input window, operand 6, single buffered']
    #allocation13 [shape = 's32[1]{0}', space=sflag, size = 0x4, scoped, tag = 'scoped memory for tpu_custom_call.1']
    #allocation14 [shape = 'u8[4096]{0}', space=vmem, size = 0x1000, scoped, tag = 'output window, operand 0, single buffered']
    %12 = vsyncpa [#allocation4], 0
    %13 = vsyncpa [#allocation7], 0
    %14 = vsyncpa [#allocation10], 0
    %15 = vsyncpa [#allocation13], 0
    %16 = vsyncpa [#allocation5], 0
    // Predicated region
    $region2: #{tpu_custom_call.1} parent=1 // pred_check
      _
    $region3: #{tpu_custom_call.1} parent=1 // pred_check_branch
      %18 = sbr.rel (0) target = $region5
    $region4: #{tpu_custom_call.1} parent=1 // pred_region
      %20 = vsyncadd [#allocation4], 0
      %s22 = sshll.u32 %s0, 4
      %s23 = int_to_ptr.hbm [resolvable:$true] %s22
      %s24 = sshll.u32 [#allocation3], 4
      %s25 = int_to_ptr.vmem [resolvable:$true] %s24
      %27 = dma.hbm_to_vmem [thread:$0]  %s23, 128, %s25, [#allocation4]
    $region5: #{tpu_custom_call.1} parent=1 // pred_fallthru
      _
    // Predicated region
    $region6: #{tpu_custom_call.1} parent=1 // pred_check
      _
    $region7: #{tpu_custom_call.1} parent=1 // pred_check_branch
      %29 = sbr.rel (0) target = $region9
    $region8: #{tpu_custom_call.1} parent=1 // pred_region
      %31 = vsyncadd [#allocation7], 0
      %s33 = sshll.u32 %s1, 4
      %s34 = int_to_ptr.hbm [resolvable:$true] %s33
      %s35 = sshll.u32 [#allocation6], 4
      %s36 = int_to_ptr.vmem [resolvable:$true] %s35
      %38 = dma.hbm_to_vmem [thread:$0]  %s34, 128, %s36, [#allocation7]
    $region9: #{tpu_custom_call.1} parent=1 // pred_fallthru
      _
    // Predicated region
    $region10: #{tpu_custom_call.1} parent=1 // pred_check
      _
    $region11: #{tpu_custom_call.1} parent=1 // pred_check_branch
      %40 = sbr.rel (0) target = $region13
    $region12: #{tpu_custom_call.1} parent=1 // pred_region
      %42 = vsyncadd [#allocation7], 0
      %s44 = sshll.u32 %s2, 4
      %s45 = int_to_ptr.hbm [resolvable:$true] %s44
      %s46 = sshll.u32 [#allocation8], 4
      %s47 = int_to_ptr.vmem [resolvable:$true] %s46
      %49 = dma.hbm_to_vmem [thread:$0]  %s45, 128, %s47, [#allocation7]
    $region13: #{tpu_custom_call.1} parent=1 // pred_fallthru
      _
    // Predicated region
    $region14: #{tpu_custom_call.1} parent=1 // pred_check
      _
    $region15: #{tpu_custom_call.1} parent=1 // pred_check_branch
      %51 = sbr.rel (0) target = $region17
    $region16: #{tpu_custom_call.1} parent=1 // pred_region
      %53 = vsyncadd [#allocation10], 0
      %s55 = sshll.u32 %s3, 4
      %s56 = int_to_ptr.hbm [resolvable:$true] %s55
      %s57 = sshll.u32 [#allocation9], 4
      %s58 = int_to_ptr.vmem [resolvable:$true] %s57
      %60 = dma.hbm_to_vmem [thread:$0]  %s56, 128, %s58, [#allocation10]
    $region17: #{tpu_custom_call.1} parent=1 // pred_fallthru
      _
    // Predicated region
    $region18: #{tpu_custom_call.1} parent=1 // pred_check
      _
    $region19: #{tpu_custom_call.1} parent=1 // pred_check_branch
      %62 = sbr.rel (0) target = $region21
    $region20: #{tpu_custom_call.1} parent=1 // pred_region
      %64 = vsyncadd [#allocation10], 0
      %s65 = sshll.u32 %s4, 4
      %s66 = int_to_ptr.hbm [resolvable:$true] %s65
      %s67 = sshll.u32 [#allocation11], 4
      %s68 = int_to_ptr.vmem [resolvable:$true] %s67
      %73 = dma.hbm_to_vmem [thread:$0]  %s66, 1024, %s68, [#allocation10], 64, 64, 4
    $region21: #{tpu_custom_call.1} parent=1 // pred_fallthru
      _
    // Predicated region
    $region22: #{tpu_custom_call.1} parent=1 // pred_check
      _
    $region23: #{tpu_custom_call.1} parent=1 // pred_check_branch
      %75 = sbr.rel (0) target = $region25
    $region24: #{tpu_custom_call.1} parent=1 // pred_region
      _
    $region25: #{tpu_custom_call.1} parent=1 // pred_fallthru
      _
    // Predicated region
    $region26: #{tpu_custom_call.1} parent=1 // pred_check
      _
    $region27: #{tpu_custom_call.1} parent=1 // pred_check_branch
      %77 = sbr.rel (0) target = $region29
    $region28: #{tpu_custom_call.1} parent=1 // pred_region
      %79 = vsyncadd [#allocation13], 0
      %s80 = sshll.u32 %s6, 4
      %s81 = int_to_ptr.hbm [resolvable:$true] %s80
      %s82 = sshll.u32 [#allocation12], 4
      %s83 = int_to_ptr.vmem [resolvable:$true] %s82
      %88 = dma.hbm_to_vmem [thread:$0]  %s81, 256, %s83, [#allocation13], 128, 128, 8
    $region29: #{tpu_custom_call.1} parent=1 // pred_fallthru
      _
    // Predicated region
    $region30: #{tpu_custom_call.1} parent=1 // pred_check
      _
    $region31: #{tpu_custom_call.1} parent=1 // pred_check_branch
      %90 = sbr.rel (0) target = $region33
    $region32: #{tpu_custom_call.1} parent=1 // pred_region
      %92 = dma.done [#allocation4], 128
    $region33: #{tpu_custom_call.1} parent=1 // pred_fallthru
      _
    // Predicated region
    $region34: #{tpu_custom_call.1} parent=1 // pred_check
      _
    $region35: #{tpu_custom_call.1} parent=1 // pred_check_branch
      %94 = sbr.rel (0) target = $region37
    $region36: #{tpu_custom_call.1} parent=1 // pred_region
      %96 = dma.done [#allocation7], 128
    $region37: #{tpu_custom_call.1} parent=1 // pred_fallthru
      _
    // Predicated region
    $region38: #{tpu_custom_call.1} parent=1 // pred_check
      _
    $region39: #{tpu_custom_call.1} parent=1 // pred_check_branch
      %98 = sbr.rel (0) target = $region41
    $region40: #{tpu_custom_call.1} parent=1 // pred_region
      %100 = dma.done [#allocation7], 128
    $region41: #{tpu_custom_call.1} parent=1 // pred_fallthru
      _
    // Predicated region
    $region42: #{tpu_custom_call.1} parent=1 // pred_check
      _
    $region43: #{tpu_custom_call.1} parent=1 // pred_check_branch
      %102 = sbr.rel (0) target = $region45
    $region44: #{tpu_custom_call.1} parent=1 // pred_region
      %104 = dma.done [#allocation10], 128
    $region45: #{tpu_custom_call.1} parent=1 // pred_fallthru
      _
    // Predicated region
    $region46: #{tpu_custom_call.1} parent=1 // pred_check
      _
    $region47: #{tpu_custom_call.1} parent=1 // pred_check_branch
      %106 = sbr.rel (0) target = $region49
    $region48: #{tpu_custom_call.1} parent=1 // pred_region
      %108 = dma.done [#allocation10], 1024
    $region49: #{tpu_custom_call.1} parent=1 // pred_fallthru
      _
    // Predicated region
    $region50: #{tpu_custom_call.1} parent=1 // pred_check
      _
    $region51: #{tpu_custom_call.1} parent=1 // pred_check_branch
      %110 = sbr.rel (0) target = $region53
    $region52: #{tpu_custom_call.1} parent=1 // pred_region
      %112 = dma.done [#allocation13], 256
    $region53: #{tpu_custom_call.1} parent=1 // pred_fallthru
      _
    %p113 = scmp.eq.s32.totalorder 0, 0
    // Predicated region
    $region54: #{tpu_custom_call.1} parent=1 // pred_check
      %p114 = pneg %p113
    $region55: #{tpu_custom_call.1} parent=1 // pred_check_branch
      %116 = sbr.rel (%p114) target = $region57
    $region56: #{tpu_custom_call.1} parent=1 // pred_region
      %117 = vst [vmem:[#allocation2] sm:$0xff] -1e+30
    $region57: #{tpu_custom_call.1} parent=1 // pred_fallthru
      _
    %v118 = vlaneseq
    %v119 = vand.u32 %v118, 127
    %v120 = vld [vmem:[#allocation3] sm:$0xff]
    %v121 = vperm.slane %v120, 0
    %v122 = vlaneseq
    %v123 = vshrl.u32 %v122, 7
    %125 = vset.pattern.permute.xlu0 %v123
    %126 = vperm.xlu0 %125, %v121
    %v127 = vpop.permute.xlu0 %126
    %v128 = vlaneseq
    %v129 = vshrl.u32 %v128, 7
    %v130 = vadd.s32 %v129, 8
    %131 = vset.pattern.permute.xlu0 %v130
    %132 = vperm.xlu0 %131, %v121
    %v133 = vpop.permute.xlu0 %132
    %v134 = vperm.slane %v120, 1
    %v135 = vlaneseq
    %v136 = vshrl.u32 %v135, 7
    %138 = vset.pattern.permute.xlu0 %v136
    %139 = vperm.xlu0 %138, %v134
    %v140 = vpop.permute.xlu0 %139
    %v141 = vlaneseq
    %v142 = vshrl.u32 %v141, 7
    %v143 = vadd.s32 %v142, 8
    %144 = vset.pattern.permute.xlu0 %v143
    %145 = vperm.xlu0 %144, %v134
    %v146 = vpop.permute.xlu0 %145
    %v147 = vperm.slane %v120, 2
    %v148 = vlaneseq
    %v149 = vshrl.u32 %v148, 7
    %151 = vset.pattern.permute.xlu0 %v149
    %152 = vperm.xlu0 %151, %v147
    %v153 = vpop.permute.xlu0 %152
    %v154 = vlaneseq
    %v155 = vshrl.u32 %v154, 7
    %v156 = vadd.s32 %v155, 8
    %157 = vset.pattern.permute.xlu0 %v156
    %158 = vperm.xlu0 %157, %v147
    %v159 = vpop.permute.xlu0 %158
    %v160 = vperm.slane %v120, 3
    %v161 = vlaneseq
    %v162 = vshrl.u32 %v161, 7
    %164 = vset.pattern.permute.xlu0 %v162
    %165 = vperm.xlu0 %164, %v160
    %v166 = vpop.permute.xlu0 %165
    %v167 = vlaneseq
    %v168 = vshrl.u32 %v167, 7
    %v169 = vadd.s32 %v168, 8
    %170 = vset.pattern.permute.xlu0 %v169
    %171 = vperm.xlu0 %170, %v160
    %v172 = vpop.permute.xlu0 %171
    %v173 = vperm.slane %v120, 4
    %v174 = vlaneseq
    %v175 = vshrl.u32 %v174, 7
    %177 = vset.pattern.permute.xlu0 %v175
    %178 = vperm.xlu0 %177, %v173
    %v179 = vpop.permute.xlu0 %178
    %v180 = vlaneseq
    %v181 = vshrl.u32 %v180, 7
    %v182 = vadd.s32 %v181, 8
    %183 = vset.pattern.permute.xlu0 %v182
    %184 = vperm.xlu0 %183, %v173
    %v185 = vpop.permute.xlu0 %184
    %v186 = vperm.slane %v120, 5
    %v187 = vlaneseq
    %v188 = vshrl.u32 %v187, 7
    %190 = vset.pattern.permute.xlu0 %v188
    %191 = vperm.xlu0 %190, %v186
    %v192 = vpop.permute.xlu0 %191
    %v193 = vlaneseq
    %v194 = vshrl.u32 %v193, 7
    %v195 = vadd.s32 %v194, 8
    %196 = vset.pattern.permute.xlu0 %v195
    %197 = vperm.xlu0 %196, %v186
    %v198 = vpop.permute.xlu0 %197
    %v199 = vperm.slane %v120, 6
    %v200 = vlaneseq
    %v201 = vshrl.u32 %v200, 7
    %203 = vset.pattern.permute.xlu0 %v201
    %204 = vperm.xlu0 %203, %v199
    %v205 = vpop.permute.xlu0 %204
    %v206 = vlaneseq
    %v207 = vshrl.u32 %v206, 7
    %v208 = vadd.s32 %v207, 8
    %209 = vset.pattern.permute.xlu0 %v208
    %210 = vperm.xlu0 %209, %v199
    %v211 = vpop.permute.xlu0 %210
    %v212 = vperm.slane %v120, 7
    %v213 = vlaneseq
    %v214 = vshrl.u32 %v213, 7
    %216 = vset.pattern.permute.xlu0 %v214
    %217 = vperm.xlu0 %216, %v212
    %v218 = vpop.permute.xlu0 %217
    %v219 = vlaneseq
    %v220 = vshrl.u32 %v219, 7
    %v221 = vadd.s32 %v220, 8
    %222 = vset.pattern.permute.xlu0 %v221
    %223 = vperm.xlu0 %222, %v212
    %v224 = vpop.permute.xlu0 %223
    %vm225 = vcmp.eq.s32.totalorder %v119, %v127
    %vm226 = vcmp.eq.s32.totalorder %v119, %v133
    %vm227 = vcmp.eq.s32.totalorder %v119, %v140
    %vm228 = vcmp.eq.s32.totalorder %v119, %v146
    %vm229 = vcmp.eq.s32.totalorder %v119, %v153
    %vm230 = vcmp.eq.s32.totalorder %v119, %v159
    %vm231 = vcmp.eq.s32.totalorder %v119, %v166
    %vm232 = vcmp.eq.s32.totalorder %v119, %v172
    %vm233 = vcmp.eq.s32.totalorder %v119, %v179
    %vm234 = vcmp.eq.s32.totalorder %v119, %v185
    %vm235 = vcmp.eq.s32.totalorder %v119, %v192
    %vm236 = vcmp.eq.s32.totalorder %v119, %v198
    %vm237 = vcmp.eq.s32.totalorder %v119, %v205
    %vm238 = vcmp.eq.s32.totalorder %v119, %v211
    %vm239 = vcmp.eq.s32.totalorder %v119, %v218
    %vm240 = vcmp.eq.s32.totalorder %v119, %v224
    %v241 = vld [vmem:[#allocation6] sm:$0xff]
    %v242 = vperm.slane %v241, 0
    %v243 = vlaneseq
    %v244 = vshrl.u32 %v243, 7
    %246 = vset.pattern.permute.xlu0 %v244
    %247 = vperm.xlu0 %246, %v242
    %v248 = vpop.permute.xlu0 %247
    %v249 = vlaneseq
    %v250 = vshrl.u32 %v249, 7
    %v251 = vadd.s32 %v250, 8
    %252 = vset.pattern.permute.xlu0 %v251
    %253 = vperm.xlu0 %252, %v242
    %v254 = vpop.permute.xlu0 %253
    %v255 = vperm.slane %v241, 1
    %v256 = vlaneseq
    %v257 = vshrl.u32 %v256, 7
    %259 = vset.pattern.permute.xlu0 %v257
    %260 = vperm.xlu0 %259, %v255
    %v261 = vpop.permute.xlu0 %260
    %v262 = vlaneseq
    %v263 = vshrl.u32 %v262, 7
    %v264 = vadd.s32 %v263, 8
    %265 = vset.pattern.permute.xlu0 %v264
    %266 = vperm.xlu0 %265, %v255
    %v267 = vpop.permute.xlu0 %266
    %v268 = vperm.slane %v241, 2
    %v269 = vlaneseq
    %v270 = vshrl.u32 %v269, 7
    %272 = vset.pattern.permute.xlu0 %v270
    %273 = vperm.xlu0 %272, %v268
    %v274 = vpop.permute.xlu0 %273
    %v275 = vlaneseq
    %v276 = vshrl.u32 %v275, 7
    %v277 = vadd.s32 %v276, 8
    %278 = vset.pattern.permute.xlu0 %v277
    %279 = vperm.xlu0 %278, %v268
    %v280 = vpop.permute.xlu0 %279
    %v281 = vperm.slane %v241, 3
    %v282 = vlaneseq
    %v283 = vshrl.u32 %v282, 7
    %285 = vset.pattern.permute.xlu0 %v283
    %286 = vperm.xlu0 %285, %v281
    %v287 = vpop.permute.xlu0 %286
    %v288 = vlaneseq
    %v289 = vshrl.u32 %v288, 7
    %v290 = vadd.s32 %v289, 8
    %291 = vset.pattern.permute.xlu0 %v290
    %292 = vperm.xlu0 %291, %v281
    %v293 = vpop.permute.xlu0 %292
    %v294 = vperm.slane %v241, 4
    %v295 = vlaneseq
    %v296 = vshrl.u32 %v295, 7
    %298 = vset.pattern.permute.xlu0 %v296
    %299 = vperm.xlu0 %298, %v294
    %v300 = vpop.permute.xlu0 %299
    %v301 = vlaneseq
    %v302 = vshrl.u32 %v301, 7
    %v303 = vadd.s32 %v302, 8
    %304 = vset.pattern.permute.xlu0 %v303
    %305 = vperm.xlu0 %304, %v294
    %v306 = vpop.permute.xlu0 %305
    %v307 = vperm.slane %v241, 5
    %v308 = vlaneseq
    %v309 = vshrl.u32 %v308, 7
    %311 = vset.pattern.permute.xlu0 %v309
    %312 = vperm.xlu0 %311, %v307
    %v313 = vpop.permute.xlu0 %312
    %v314 = vlaneseq
    %v315 = vshrl.u32 %v314, 7
    %v316 = vadd.s32 %v315, 8
    %317 = vset.pattern.permute.xlu0 %v316
    %318 = vperm.xlu0 %317, %v307
    %v319 = vpop.permute.xlu0 %318
    %v320 = vperm.slane %v241, 6
    %v321 = vlaneseq
    %v322 = vshrl.u32 %v321, 7
    %324 = vset.pattern.permute.xlu0 %v322
    %325 = vperm.xlu0 %324, %v320
    %v326 = vpop.permute.xlu0 %325
    %v327 = vlaneseq
    %v328 = vshrl.u32 %v327, 7
    %v329 = vadd.s32 %v328, 8
    %330 = vset.pattern.permute.xlu0 %v329
    %331 = vperm.xlu0 %330, %v320
    %v332 = vpop.permute.xlu0 %331
    %v333 = vperm.slane %v241, 7
    %v334 = vlaneseq
    %v335 = vshrl.u32 %v334, 7
    %337 = vset.pattern.permute.xlu0 %v335
    %338 = vperm.xlu0 %337, %v333
    %v339 = vpop.permute.xlu0 %338
    %v340 = vlaneseq
    %v341 = vshrl.u32 %v340, 7
    %v342 = vadd.s32 %v341, 8
    %343 = vset.pattern.permute.xlu0 %v342
    %344 = vperm.xlu0 %343, %v333
    %v345 = vpop.permute.xlu0 %344
    %vm346 = vcmp.eq.s32.totalorder %v119, %v248
    %vm347 = vcmp.eq.s32.totalorder %v119, %v254
    %vm348 = vcmp.eq.s32.totalorder %v119, %v261
    %vm349 = vcmp.eq.s32.totalorder %v119, %v267
    %vm350 = vcmp.eq.s32.totalorder %v119, %v274
    %vm351 = vcmp.eq.s32.totalorder %v119, %v280
    %vm352 = vcmp.eq.s32.totalorder %v119, %v287
    %vm353 = vcmp.eq.s32.totalorder %v119, %v293
    %vm354 = vcmp.eq.s32.totalorder %v119, %v300
    %vm355 = vcmp.eq.s32.totalorder %v119, %v306
    %vm356 = vcmp.eq.s32.totalorder %v119, %v313
    %vm357 = vcmp.eq.s32.totalorder %v119, %v319
    %vm358 = vcmp.eq.s32.totalorder %v119, %v326
    %vm359 = vcmp.eq.s32.totalorder %v119, %v332
    %vm360 = vcmp.eq.s32.totalorder %v119, %v339
    %vm361 = vcmp.eq.s32.totalorder %v119, %v345
    %vm362 = vmor %vm225, %vm346
    %vm363 = vmor %vm226, %vm347
    %vm364 = vmor %vm227, %vm348
    %vm365 = vmor %vm228, %vm349
    %vm366 = vmor %vm229, %vm350
    %vm367 = vmor %vm230, %vm351
    %vm368 = vmor %vm231, %vm352
    %vm369 = vmor %vm232, %vm353
    %vm370 = vmor %vm233, %vm354
    %vm371 = vmor %vm234, %vm355
    %vm372 = vmor %vm235, %vm356
    %vm373 = vmor %vm236, %vm357
    %vm374 = vmor %vm237, %vm358
    %vm375 = vmor %vm238, %vm359
    %vm376 = vmor %vm239, %vm360
    %vm377 = vmor %vm240, %vm361
    %v378 = vld [vmem:[#allocation8] sm:$0xff]
    %v379 = vperm.slane %v378, 0
    %v380 = vlaneseq
    %v381 = vshrl.u32 %v380, 7
    %383 = vset.pattern.permute.xlu0 %v381
    %384 = vperm.xlu0 %383, %v379
    %v385 = vpop.permute.xlu0 %384
    %v386 = vlaneseq
    %v387 = vshrl.u32 %v386, 7
    %v388 = vadd.s32 %v387, 8
    %389 = vset.pattern.permute.xlu0 %v388
    %390 = vperm.xlu0 %389, %v379
    %v391 = vpop.permute.xlu0 %390
    %v392 = vperm.slane %v378, 1
    %v393 = vlaneseq
    %v394 = vshrl.u32 %v393, 7
    %396 = vset.pattern.permute.xlu0 %v394
    %397 = vperm.xlu0 %396, %v392
    %v398 = vpop.permute.xlu0 %397
    %v399 = vlaneseq
    %v400 = vshrl.u32 %v399, 7
    %v401 = vadd.s32 %v400, 8
    %402 = vset.pattern.permute.xlu0 %v401
    %403 = vperm.xlu0 %402, %v392
    %v404 = vpop.permute.xlu0 %403
    %v405 = vperm.slane %v378, 2
    %v406 = vlaneseq
    %v407 = vshrl.u32 %v406, 7
    %409 = vset.pattern.permute.xlu0 %v407
    %410 = vperm.xlu0 %409, %v405
    %v411 = vpop.permute.xlu0 %410
    %v412 = vlaneseq
    %v413 = vshrl.u32 %v412, 7
    %v414 = vadd.s32 %v413, 8
    %415 = vset.pattern.permute.xlu0 %v414
    %416 = vperm.xlu0 %415, %v405
    %v417 = vpop.permute.xlu0 %416
    %v418 = vperm.slane %v378, 3
    %v419 = vlaneseq
    %v420 = vshrl.u32 %v419, 7
    %422 = vset.pattern.permute.xlu0 %v420
    %423 = vperm.xlu0 %422, %v418
    %v424 = vpop.permute.xlu0 %423
    %v425 = vlaneseq
    %v426 = vshrl.u32 %v425, 7
    %v427 = vadd.s32 %v426, 8
    %428 = vset.pattern.permute.xlu0 %v427
    %429 = vperm.xlu0 %428, %v418
    %v430 = vpop.permute.xlu0 %429
    %v431 = vperm.slane %v378, 4
    %v432 = vlaneseq
    %v433 = vshrl.u32 %v432, 7
    %435 = vset.pattern.permute.xlu0 %v433
    %436 = vperm.xlu0 %435, %v431
    %v437 = vpop.permute.xlu0 %436
    %v438 = vlaneseq
    %v439 = vshrl.u32 %v438, 7
    %v440 = vadd.s32 %v439, 8
    %441 = vset.pattern.permute.xlu0 %v440
    %442 = vperm.xlu0 %441, %v431
    %v443 = vpop.permute.xlu0 %442
    %v444 = vperm.slane %v378, 5
    %v445 = vlaneseq
    %v446 = vshrl.u32 %v445, 7
    %448 = vset.pattern.permute.xlu0 %v446
    %449 = vperm.xlu0 %448, %v444
    %v450 = vpop.permute.xlu0 %449
    %v451 = vlaneseq
    %v452 = vshrl.u32 %v451, 7
    %v453 = vadd.s32 %v452, 8
    %454 = vset.pattern.permute.xlu0 %v453
    %455 = vperm.xlu0 %454, %v444
    %v456 = vpop.permute.xlu0 %455
    %v457 = vperm.slane %v378, 6
    %v458 = vlaneseq
    %v459 = vshrl.u32 %v458, 7
    %461 = vset.pattern.permute.xlu0 %v459
    %462 = vperm.xlu0 %461, %v457
    %v463 = vpop.permute.xlu0 %462
    %v464 = vlaneseq
    %v465 = vshrl.u32 %v464, 7
    %v466 = vadd.s32 %v465, 8
    %467 = vset.pattern.permute.xlu0 %v466
    %468 = vperm.xlu0 %467, %v457
    %v469 = vpop.permute.xlu0 %468
    %v470 = vperm.slane %v378, 7
    %v471 = vlaneseq
    %v472 = vshrl.u32 %v471, 7
    %474 = vset.pattern.permute.xlu0 %v472
    %475 = vperm.xlu0 %474, %v470
    %v476 = vpop.permute.xlu0 %475
    %v477 = vlaneseq
    %v478 = vshrl.u32 %v477, 7
    %v479 = vadd.s32 %v478, 8
    %480 = vset.pattern.permute.xlu0 %v479
    %481 = vperm.xlu0 %480, %v470
    %v482 = vpop.permute.xlu0 %481
    %vm483 = vcmp.eq.s32.totalorder %v119, %v385
    %vm484 = vcmp.eq.s32.totalorder %v119, %v391
    %vm485 = vcmp.eq.s32.totalorder %v119, %v398
    %vm486 = vcmp.eq.s32.totalorder %v119, %v404
    %vm487 = vcmp.eq.s32.totalorder %v119, %v411
    %vm488 = vcmp.eq.s32.totalorder %v119, %v417
    %vm489 = vcmp.eq.s32.totalorder %v119, %v424
    %vm490 = vcmp.eq.s32.totalorder %v119, %v430
    %vm491 = vcmp.eq.s32.totalorder %v119, %v437
    %vm492 = vcmp.eq.s32.totalorder %v119, %v443
    %vm493 = vcmp.eq.s32.totalorder %v119, %v450
    %vm494 = vcmp.eq.s32.totalorder %v119, %v456
    %vm495 = vcmp.eq.s32.totalorder %v119, %v463
    %vm496 = vcmp.eq.s32.totalorder %v119, %v469
    %vm497 = vcmp.eq.s32.totalorder %v119, %v476
    %vm498 = vcmp.eq.s32.totalorder %v119, %v482
    %vm499 = vmor %vm362, %vm483
    %vm500 = vmor %vm363, %vm484
    %vm501 = vmor %vm364, %vm485
    %vm502 = vmor %vm365, %vm486
    %vm503 = vmor %vm366, %vm487
    %vm504 = vmor %vm367, %vm488
    %vm505 = vmor %vm368, %vm489
    %vm506 = vmor %vm369, %vm490
    %vm507 = vmor %vm370, %vm491
    %vm508 = vmor %vm371, %vm492
    %vm509 = vmor %vm372, %vm493
    %vm510 = vmor %vm373, %vm494
    %vm511 = vmor %vm374, %vm495
    %vm512 = vmor %vm375, %vm496
    %vm513 = vmor %vm376, %vm497
    %vm514 = vmor %vm377, %vm498
    %v515 = vld [vmem:[#allocation9] sm:$0xff]
    %v516 = vperm.slane %v515, 0
    %v517 = vlaneseq
    %v518 = vshrl.u32 %v517, 7
    %520 = vset.pattern.permute.xlu0 %v518
    %521 = vperm.xlu0 %520, %v516
    %v522 = vpop.permute.xlu0 %521
    %v523 = vlaneseq
    %v524 = vshrl.u32 %v523, 7
    %v525 = vadd.s32 %v524, 8
    %526 = vset.pattern.permute.xlu0 %v525
    %527 = vperm.xlu0 %526, %v516
    %v528 = vpop.permute.xlu0 %527
    %v529 = vperm.slane %v515, 1
    %v530 = vlaneseq
    %v531 = vshrl.u32 %v530, 7
    %533 = vset.pattern.permute.xlu0 %v531
    %534 = vperm.xlu0 %533, %v529
    %v535 = vpop.permute.xlu0 %534
    %v536 = vlaneseq
    %v537 = vshrl.u32 %v536, 7
    %v538 = vadd.s32 %v537, 8
    %539 = vset.pattern.permute.xlu0 %v538
    %540 = vperm.xlu0 %539, %v529
    %v541 = vpop.permute.xlu0 %540
    %v542 = vperm.slane %v515, 2
    %v543 = vlaneseq
    %v544 = vshrl.u32 %v543, 7
    %546 = vset.pattern.permute.xlu0 %v544
    %547 = vperm.xlu0 %546, %v542
    %v548 = vpop.permute.xlu0 %547
    %v549 = vlaneseq
    %v550 = vshrl.u32 %v549, 7
    %v551 = vadd.s32 %v550, 8
    %552 = vset.pattern.permute.xlu0 %v551
    %553 = vperm.xlu0 %552, %v542
    %v554 = vpop.permute.xlu0 %553
    %v555 = vperm.slane %v515, 3
    %v556 = vlaneseq
    %v557 = vshrl.u32 %v556, 7
    %559 = vset.pattern.permute.xlu0 %v557
    %560 = vperm.xlu0 %559, %v555
    %v561 = vpop.permute.xlu0 %560
    %v562 = vlaneseq
    %v563 = vshrl.u32 %v562, 7
    %v564 = vadd.s32 %v563, 8
    %565 = vset.pattern.permute.xlu0 %v564
    %566 = vperm.xlu0 %565, %v555
    %v567 = vpop.permute.xlu0 %566
    %v568 = vperm.slane %v515, 4
    %v569 = vlaneseq
    %v570 = vshrl.u32 %v569, 7
    %572 = vset.pattern.permute.xlu0 %v570
    %573 = vperm.xlu0 %572, %v568
    %v574 = vpop.permute.xlu0 %573
    %v575 = vlaneseq
    %v576 = vshrl.u32 %v575, 7
    %v577 = vadd.s32 %v576, 8
    %578 = vset.pattern.permute.xlu0 %v577
    %579 = vperm.xlu0 %578, %v568
    %v580 = vpop.permute.xlu0 %579
    %v581 = vperm.slane %v515, 5
    %v582 = vlaneseq
    %v583 = vshrl.u32 %v582, 7
    %585 = vset.pattern.permute.xlu0 %v583
    %586 = vperm.xlu0 %585, %v581
    %v587 = vpop.permute.xlu0 %586
    %v588 = vlaneseq
    %v589 = vshrl.u32 %v588, 7
    %v590 = vadd.s32 %v589, 8
    %591 = vset.pattern.permute.xlu0 %v590
    %592 = vperm.xlu0 %591, %v581
    %v593 = vpop.permute.xlu0 %592
    %v594 = vperm.slane %v515, 6
    %v595 = vlaneseq
    %v596 = vshrl.u32 %v595, 7
    %598 = vset.pattern.permute.xlu0 %v596
    %599 = vperm.xlu0 %598, %v594
    %v600 = vpop.permute.xlu0 %599
    %v601 = vlaneseq
    %v602 = vshrl.u32 %v601, 7
    %v603 = vadd.s32 %v602, 8
    %604 = vset.pattern.permute.xlu0 %v603
    %605 = vperm.xlu0 %604, %v594
    %v606 = vpop.permute.xlu0 %605
    %v607 = vperm.slane %v515, 7
    %v608 = vlaneseq
    %v609 = vshrl.u32 %v608, 7
    %611 = vset.pattern.permute.xlu0 %v609
    %612 = vperm.xlu0 %611, %v607
    %v613 = vpop.permute.xlu0 %612
    %v614 = vlaneseq
    %v615 = vshrl.u32 %v614, 7
    %v616 = vadd.s32 %v615, 8
    %617 = vset.pattern.permute.xlu0 %v616
    %618 = vperm.xlu0 %617, %v607
    %v619 = vpop.permute.xlu0 %618
    %vm620 = vcmp.eq.s32.totalorder %v119, %v522
    %vm621 = vcmp.eq.s32.totalorder %v119, %v528
    %vm622 = vcmp.eq.s32.totalorder %v119, %v535
    %vm623 = vcmp.eq.s32.totalorder %v119, %v541
    %vm624 = vcmp.eq.s32.totalorder %v119, %v548
    %vm625 = vcmp.eq.s32.totalorder %v119, %v554
    %vm626 = vcmp.eq.s32.totalorder %v119, %v561
    %vm627 = vcmp.eq.s32.totalorder %v119, %v567
    %vm628 = vcmp.eq.s32.totalorder %v119, %v574
    %vm629 = vcmp.eq.s32.totalorder %v119, %v580
    %vm630 = vcmp.eq.s32.totalorder %v119, %v587
    %vm631 = vcmp.eq.s32.totalorder %v119, %v593
    %vm632 = vcmp.eq.s32.totalorder %v119, %v600
    %vm633 = vcmp.eq.s32.totalorder %v119, %v606
    %vm634 = vcmp.eq.s32.totalorder %v119, %v613
    %vm635 = vcmp.eq.s32.totalorder %v119, %v619
    %vm636 = vmor %vm499, %vm620
    %vm637 = vmor %vm500, %vm621
    %vm638 = vmor %vm501, %vm622
    %vm639 = vmor %vm502, %vm623
    %vm640 = vmor %vm503, %vm624
    %vm641 = vmor %vm504, %vm625
    %vm642 = vmor %vm505, %vm626
    %vm643 = vmor %vm506, %vm627
    %vm644 = vmor %vm507, %vm628
    %vm645 = vmor %vm508, %vm629
    %vm646 = vmor %vm509, %vm630
    %vm647 = vmor %vm510, %vm631
    %vm648 = vmor %vm511, %vm632
    %vm649 = vmor %vm512, %vm633
    %vm650 = vmor %vm513, %vm634
    %vm651 = vmor %vm514, %vm635
    %v652 = vsel %vm636, 1, 0
    %v653 = vsel %vm637, 1, 0
    %v654 = vsel %vm638, 1, 0
    %v655 = vsel %vm639, 1, 0
    %v656 = vsel %vm640, 1, 0
    %v657 = vsel %vm641, 1, 0
    %v658 = vsel %vm642, 1, 0
    %v659 = vsel %vm643, 1, 0
    %v660 = vsel %vm644, 1, 0
    %v661 = vsel %vm645, 1, 0
    %v662 = vsel %vm646, 1, 0
    %v663 = vsel %vm647, 1, 0
    %v664 = vsel %vm648, 1, 0
    %v665 = vsel %vm649, 1, 0
    %v666 = vsel %vm650, 1, 0
    %v667 = vsel %vm651, 1, 0
    %v668 = vcvt.s32.f32 %v652
    %v669 = vcvt.s32.f32 %v653
    %v670 = vcvt.s32.f32 %v654
    %v671 = vcvt.s32.f32 %v655
    %v672 = vcvt.s32.f32 %v656
    %v673 = vcvt.s32.f32 %v657
    %v674 = vcvt.s32.f32 %v658
    %v675 = vcvt.s32.f32 %v659
    %v676 = vcvt.s32.f32 %v660
    %v677 = vcvt.s32.f32 %v661
    %v678 = vcvt.s32.f32 %v662
    %v679 = vcvt.s32.f32 %v663
    %v680 = vcvt.s32.f32 %v664
    %v681 = vcvt.s32.f32 %v665
    %v682 = vcvt.s32.f32 %v666
    %v683 = vcvt.s32.f32 %v667
    %v684 = vpack.c.bf16 %v668, %v668
    %v685 = vpack.c.bf16 %v669, %v669
    %v686 = vpack.c.bf16 %v670, %v670
    %v687 = vpack.c.bf16 %v671, %v671
    %v688 = vpack.c.bf16 %v672, %v672
    %v689 = vpack.c.bf16 %v673, %v673
    %v690 = vpack.c.bf16 %v674, %v674
    %v691 = vpack.c.bf16 %v675, %v675
    %v692 = vpack.c.bf16 %v676, %v676
    %v693 = vpack.c.bf16 %v677, %v677
    %v694 = vpack.c.bf16 %v678, %v678
    %v695 = vpack.c.bf16 %v679, %v679
    %v696 = vpack.c.bf16 %v680, %v680
    %v697 = vpack.c.bf16 %v681, %v681
    %v698 = vpack.c.bf16 %v682, %v682
    %v699 = vpack.c.bf16 %v683, %v683
    %v700 = vld [vmem:[#allocation11] sm:$0xf]
    %v701 = vld [vmem:[#allocation11 + $0x4] sm:$0xf]
    %v702 = vld [vmem:[#allocation11 + $0x8] sm:$0xf]
    %v703 = vld [vmem:[#allocation11 + $0xc] sm:$0xf]
    %v704 = vld [vmem:[#allocation11 + $0x10] sm:$0xf]
    %v705 = vld [vmem:[#allocation11 + $0x14] sm:$0xf]
    %v706 = vld [vmem:[#allocation11 + $0x18] sm:$0xf]
    %v707 = vld [vmem:[#allocation11 + $0x1c] sm:$0xf]
    %v708 = vld [vmem:[#allocation11 + $0x20] sm:$0xf]
    %v709 = vld [vmem:[#allocation11 + $0x24] sm:$0xf]
    %v710 = vld [vmem:[#allocation11 + $0x28] sm:$0xf]
    %v711 = vld [vmem:[#allocation11 + $0x2c] sm:$0xf]
    %v712 = vld [vmem:[#allocation11 + $0x30] sm:$0xf]
    %v713 = vld [vmem:[#allocation11 + $0x34] sm:$0xf]
    %v714 = vld [vmem:[#allocation11 + $0x38] sm:$0xf]
    %v715 = vld [vmem:[#allocation11 + $0x3c] sm:$0xf]
    %v732 = vunpack.c.l.b16 %v684
    %v733 = vunpack.c.l.b16 %v685
    %v734 = vunpack.c.l.b16 %v686
    %v735 = vunpack.c.l.b16 %v687
    %v736 = vunpack.c.l.b16 %v688
    %v737 = vunpack.c.l.b16 %v689
    %v738 = vunpack.c.l.b16 %v690
    %v739 = vunpack.c.l.b16 %v691
    %v740 = vunpack.c.l.b16 %v692
    %v741 = vunpack.c.l.b16 %v693
    %v742 = vunpack.c.l.b16 %v694
    %v743 = vunpack.c.l.b16 %v695
    %v744 = vunpack.c.l.b16 %v696
    %v745 = vunpack.c.l.b16 %v697
    %v746 = vunpack.c.l.b16 %v698
    %v747 = vunpack.c.l.b16 %v699
    %v748 = vpack.c.b16 %v733, %v732
    %v749 = vpack.c.b16 %v735, %v734
    %v750 = vpack.c.b16 %v737, %v736
    %v751 = vpack.c.b16 %v739, %v738
    %v752 = vpack.c.b16 %v741, %v740
    %v753 = vpack.c.b16 %v743, %v742
    %v754 = vpack.c.b16 %v745, %v744
    %v755 = vpack.c.b16 %v747, %v746
    %v780 = vunpack.c.l.b16 %v700
    %v781 = vunpack.c.l.b16 %v701
    %v782 = vunpack.c.l.b16 %v702
    %v783 = vunpack.c.l.b16 %v703
    %v784 = vunpack.c.l.b16 %v704
    %v785 = vunpack.c.l.b16 %v705
    %v786 = vunpack.c.l.b16 %v706
    %v787 = vunpack.c.l.b16 %v707
    %v788 = vunpack.c.l.b16 %v708
    %v789 = vunpack.c.l.b16 %v709
    %v790 = vunpack.c.l.b16 %v710
    %v791 = vunpack.c.l.b16 %v711
    %v792 = vunpack.c.l.b16 %v712
    %v793 = vunpack.c.l.b16 %v713
    %v794 = vunpack.c.l.b16 %v714
    %v795 = vunpack.c.l.b16 %v715
    %v796 = vpack.c.b16 %v781, %v780
    %v797 = vpack.c.b16 %v783, %v782
    %v798 = vpack.c.b16 %v785, %v784
    %v799 = vpack.c.b16 %v787, %v786
    %v800 = vpack.c.b16 %v789, %v788
    %v801 = vpack.c.b16 %v791, %v790
    %v802 = vpack.c.b16 %v793, %v792
    %v803 = vpack.c.b16 %v795, %v794
    %812 = vmatpush.bf16.msra.mxu0 %v803
    %813 = vmatpush.bf16.msra.mxu0 %v802
    %814 = vmatpush.bf16.msra.mxu0 %v801
    %815 = vmatpush.bf16.msra.mxu0 %v800
    %816 = vmatpush.bf16.msra.mxu0 %v799
    %817 = vmatpush.bf16.msra.mxu0 %v798
    %818 = vmatpush.bf16.msra.mxu0 %v797
    %819 = vmatpush.bf16.msra.mxu0 %v796
    %820 = vmatmul.bf16.gmra.mxu0 %v748
    %v821 = vpop.f32.mrf.mxu0
    %v822 = vadd.f32 0.0, %v821
    %v823 = vpop.f32.mrf.mxu0
    %v824 = vadd.f32 0.0, %v823
    %825 = vmatmul.bf16.gmra.mxu0 %v749
    %v826 = vpop.f32.mrf.mxu0
    %v827 = vadd.f32 0.0, %v826
    %v828 = vpop.f32.mrf.mxu0
    %v829 = vadd.f32 0.0, %v828
    %830 = vmatmul.bf16.gmra.mxu0 %v750
    %v831 = vpop.f32.mrf.mxu0
    %v832 = vadd.f32 0.0, %v831
    %v833 = vpop.f32.mrf.mxu0
    %v834 = vadd.f32 0.0, %v833
    %835 = vmatmul.bf16.gmra.mxu0 %v751
    %v836 = vpop.f32.mrf.mxu0
    %v837 = vadd.f32 0.0, %v836
    %v838 = vpop.f32.mrf.mxu0
    %v839 = vadd.f32 0.0, %v838
    %840 = vmatmul.bf16.gmra.mxu0 %v752
    %v841 = vpop.f32.mrf.mxu0
    %v842 = vadd.f32 0.0, %v841
    %v843 = vpop.f32.mrf.mxu0
    %v844 = vadd.f32 0.0, %v843
    %845 = vmatmul.bf16.gmra.mxu0 %v753
    %v846 = vpop.f32.mrf.mxu0
    %v847 = vadd.f32 0.0, %v846
    %v848 = vpop.f32.mrf.mxu0
    %v849 = vadd.f32 0.0, %v848
    %850 = vmatmul.bf16.gmra.mxu0 %v754
    %v851 = vpop.f32.mrf.mxu0
    %v852 = vadd.f32 0.0, %v851
    %v853 = vpop.f32.mrf.mxu0
    %v854 = vadd.f32 0.0, %v853
    %855 = vmatmul.bf16.gmra.mxu0 %v755
    %v856 = vpop.f32.mrf.mxu0
    %v857 = vadd.f32 0.0, %v856
    %v858 = vpop.f32.mrf.mxu0
    %v859 = vadd.f32 0.0, %v858
    %860 = vdwg.mxu0
    %v861 = vld [vmem:[#allocation12] sm:$0xff]
    %v862 = vld [vmem:[#allocation12 + $0x8] sm:$0xff]
    %v863 = vadd.f32 %v822, %v861
    %v864 = vadd.f32 %v824, %v862
    %v865 = vadd.f32 %v827, %v861
    %v866 = vadd.f32 %v829, %v862
    %v867 = vadd.f32 %v832, %v861
    %v868 = vadd.f32 %v834, %v862
    %v869 = vadd.f32 %v837, %v861
    %v870 = vadd.f32 %v839, %v862
    %v871 = vadd.f32 %v842, %v861
    %v872 = vadd.f32 %v844, %v862
    %v873 = vadd.f32 %v847, %v861
    %v874 = vadd.f32 %v849, %v862
    %v875 = vadd.f32 %v852, %v861
    %v876 = vadd.f32 %v854, %v862
    %v877 = vadd.f32 %v857, %v861
    %v878 = vadd.f32 %v859, %v862
    %v879 = vld [vmem:[#allocation2] sm:$0xff]
    %v880 = vmax.f32 %v863, %v864
    %v881 = vrot.slane %v880, 4
    %v882 = vmax.f32 %v880, %v881
    %v883 = vrot.slane %v882, 2
    %v884 = vmax.f32 %v882, %v883
    %v885 = vrot.slane %v884, 1
    %v886 = vmax.f32 %v884, %v885
    %v887 = vmax.f32 %v865, %v866
    %v888 = vrot.slane %v887, 4
    %v889 = vmax.f32 %v887, %v888
    %v890 = vrot.slane %v889, 2
    %v891 = vmax.f32 %v889, %v890
    %v892 = vrot.slane %v891, 1
    %v893 = vmax.f32 %v891, %v892
    %v894 = vmax.f32 %v867, %v868
    %v895 = vrot.slane %v894, 4
    %v896 = vmax.f32 %v894, %v895
    %v897 = vrot.slane %v896, 2
    %v898 = vmax.f32 %v896, %v897
    %v899 = vrot.slane %v898, 1
    %v900 = vmax.f32 %v898, %v899
    %v901 = vmax.f32 %v869, %v870
    %v902 = vrot.slane %v901, 4
    %v903 = vmax.f32 %v901, %v902
    %v904 = vrot.slane %v903, 2
    %v905 = vmax.f32 %v903, %v904
    %v906 = vrot.slane %v905, 1
    %v907 = vmax.f32 %v905, %v906
    %v908 = vmax.f32 %v871, %v872
    %v909 = vrot.slane %v908, 4
    %v910 = vmax.f32 %v908, %v909
    %v911 = vrot.slane %v910, 2
    %v912 = vmax.f32 %v910, %v911
    %v913 = vrot.slane %v912, 1
    %v914 = vmax.f32 %v912, %v913
    %v915 = vmax.f32 %v873, %v874
    %v916 = vrot.slane %v915, 4
    %v917 = vmax.f32 %v915, %v916
    %v918 = vrot.slane %v917, 2
    %v919 = vmax.f32 %v917, %v918
    %v920 = vrot.slane %v919, 1
    %v921 = vmax.f32 %v919, %v920
    %v922 = vmax.f32 %v875, %v876
    %v923 = vrot.slane %v922, 4
    %v924 = vmax.f32 %v922, %v923
    %v925 = vrot.slane %v924, 2
    %v926 = vmax.f32 %v924, %v925
    %v927 = vrot.slane %v926, 1
    %v928 = vmax.f32 %v926, %v927
    %v929 = vmax.f32 %v877, %v878
    %v930 = vrot.slane %v929, 4
    %v931 = vmax.f32 %v929, %v930
    %v932 = vrot.slane %v931, 2
    %v933 = vmax.f32 %v931, %v932
    %v934 = vrot.slane %v933, 1
    %v935 = vmax.f32 %v933, %v934
    %vm944 = vcmask 1041409
    %v945 = vsel %vm944, %v893, %v886
    %vm946 = vcmask 1042434
    %v947 = vsel %vm946, %v900, %v945
    %vm948 = vcmask 1043459
    %v949 = vsel %vm948, %v907, %v947
    %vm950 = vcmask 1044484
    %v951 = vsel %vm950, %v914, %v949
    %vm952 = vcmask 1045509
    %v953 = vsel %vm952, %v921, %v951
    %vm954 = vcmask 1046534
    %v955 = vsel %vm954, %v928, %v953
    %vm956 = vcmask 1047559
    %v957 = vsel %vm956, %v935, %v955
    %v959 = vmax.f32 %v879, %v957
    %960 = vst [vmem:[#allocation2] sm:$0xff] %v959
    // Predicated region
    $region58: #{tpu_custom_call.1} parent=1 // pred_check
      %p961 = pneg %p113
    $region59: #{tpu_custom_call.1} parent=1 // pred_check_branch
      %963 = sbr.rel (%p961) target = $region61
    $region60: #{tpu_custom_call.1} parent=1 // pred_region
      %v964 = vld [vmem:[#allocation2] sm:$0xff]
      %v965 = vld [vmem:[%s5] sm:$0x1]
      %v967 = vperm.slane %v965, 0
      %v969 = vadd.f32 %v964, %v967
      %v970 = vmax.f32 %v969, 0.0
      %971 = vst [vmem:[#allocation14] sm:$0xff] %v970
    $region61: #{tpu_custom_call.1} parent=1 // pred_fallthru
      _
    // Predicated region
    $region62: #{tpu_custom_call.1} parent=1 // pred_check
      _
    $region63: #{tpu_custom_call.1} parent=1 // pred_check_branch
      %973 = sbr.rel (0) target = $region65
    $region64: #{tpu_custom_call.1} parent=1 // pred_region
      %975 = vsyncadd [#allocation5], 0
      %s977 = sshll.u32 [#allocation14], 4
      %s978 = int_to_ptr.vmem [resolvable:$true] %s977
      %s979 = sshll.u32 %s7, 4
      %s980 = int_to_ptr.hbm [resolvable:$true] %s979
      %982 = dma.vmem_to_hbm [thread:$0]  %s978, 128, %s980, [#allocation5]
    $region65: #{tpu_custom_call.1} parent=1 // pred_fallthru
      _
    // Predicated region
    $region66: #{tpu_custom_call.1} parent=1 // pred_check
      _
    $region67: #{tpu_custom_call.1} parent=1 // pred_check_branch
      %984 = sbr.rel (0) target = $region69
    $region68: #{tpu_custom_call.1} parent=1 // pred_region
      %986 = dma.done [#allocation5], 128
    $region69: #{tpu_custom_call.1} parent=1 // pred_fallthru
      _
    %987 = vsyncpa [#allocation4], 1
    %988 = vsyncpa [#allocation7], 1
    %989 = vsyncpa [#allocation10], 1
    %990 = vsyncpa [#allocation13], 1
    %991 = vsyncpa [#allocation5], 1

</llo_original>
